<compile_context>
chip_gen: v5e
topology: v5e:2x2
jax: 0.10.0
libtpu: 0.0.40
codegen_flags: <defaults>
</compile_context>

<pallas_src>
import jax
import jax.numpy as jnp
from jax.experimental import pallas as pl
from jax.experimental.pallas import tpu as pltpu


# ----------------------------------------------------------------------------
# Config (mirrors config.model.* / config.dataset.* of the PyTorch module)
# ----------------------------------------------------------------------------
VOCAB_SIZE = 50
EMBED_DIM = 32
SEQ_LEN = 16
FILTER_SIZES = (2, 3, 4)
NUM_FILTERS = (8, 8, 8)            # sum = 24 -> fc input features
NUM_CLASSES = 4
BATCH = 2

FS_MAX = max(FILTER_SIZES)         # 4  -> fused contraction K = FS_MAX*E = 128
NF_PAD = 128                       # fused conv output lanes (sum_nf padded)
C_PAD = 128                        # fc output lanes (num_classes padded)


# ----------------------------------------------------------------------------
# Fused kernel: im2col conv (all filter sizes) + bias + ReLU + masked max-pool
#               + padded FC, entirely VMEM-resident.
# ----------------------------------------------------------------------------
def textcnn_kernel(x_ref, wconv_ref, bconv_ref, mask_ref, wfc_ref, bfc_ref,
                   out_ref):
    # x_ref     : [TB, L, E]            f32 (embedded tokens for this batch tile)
    # wconv_ref : [FS_MAX*E, NF_PAD]    bf16 fused, zero-padded conv weight
    # bconv_ref : [1, NF_PAD]           f32 fused conv bias (zeros in padding)
    # mask_ref  : [L, NF_PAD]           f32 1.0 where the time position is valid
    # wfc_ref   : [NF_PAD, C_PAD]       bf16 padded, pre-transposed fc weight
    # bfc_ref   : [1, C_PAD]            f32 padded fc bias
    # out_ref   : [TB, C_PAD]           f32 padded logits
    x = x_ref[...]                                       # [TB, L, E]

    # im2col: win[:, t, k*E:(k+1)*E] = x[:, t+k, :].  Rows are built with a
    # wrap-around shift; wrapped (invalid) time positions are zeroed by the
    # validity mask before the max-pool, so the wrap never leaks.
    parts = [x]
    for k in range(1, FS_MAX):                           # static Python ints
        parts.append(jnp.concatenate([x[:, k:, :], x[:, :k, :]], axis=1))
    win = jnp.concatenate(parts, axis=-1)                # [TB, L, FS_MAX*E]
    win = win.astype(wconv_ref.dtype)                    # bf16 MXU operands

    # One fused MXU contraction for all filter sizes: K = FS_MAX*E, N = NF_PAD.
    conv = jax.lax.dot_general(
        win, wconv_ref[...],
        dimension_numbers=(((2,), (0,)), ((), ())),
        preferred_element_type=jnp.float32)              # [TB, L, NF_PAD] f32

    # f32 epilogue: single fused bias add + ReLU, then zero out invalid time
    # positions (safe post-ReLU since valid outputs are >= 0), max over time.
    conv = jnp.maximum(conv + bconv_ref[...], 0.0)
    conv = conv * mask_ref[...]
    pooled = jnp.max(conv, axis=1)                       # [TB, NF_PAD]

    # Padded, lane-dense classification head (padding rows/cols are zero).
    logits = jnp.dot(pooled.astype(wfc_ref.dtype), wfc_ref[...],
                     preferred_element_type=jnp.float32) + bfc_ref[...]
    out_ref[...] = logits.astype(out_ref.dtype)          # [TB, C_PAD]


# ----------------------------------------------------------------------------
# Parameters
# ----------------------------------------------------------------------------
def init_params(key):
    """Deterministic synthetic parameters (shapes from the module __init__)."""
    n_keys = 2 + 2 * len(FILTER_SIZES) + 2
    keys = jax.random.split(key, n_keys)
    k_iter = iter(keys)

    params = {}
    params["embedding"] = 0.02 * jax.random.normal(
        next(k_iter), (VOCAB_SIZE, EMBED_DIM), jnp.float32)

    for fs, nf in zip(FILTER_SIZES, NUM_FILTERS):
        # torch Conv2d weight [nf, 1, fs, E] stored here as [fs, E, nf]
        params[f"conv{fs}_w"] = 0.1 * jax.random.normal(
            next(k_iter), (fs, EMBED_DIM, nf), jnp.float32)
        params[f"conv{fs}_b"] = 0.1 * jax.random.normal(
            next(k_iter), (nf,), jnp.float32)

    sum_nf = sum(NUM_FILTERS)
    params["fc_w"] = 0.1 * jax.random.normal(
        next(k_iter), (NUM_CLASSES, sum_nf), jnp.float32)   # torch Linear layout
    params["fc_b"] = 0.1 * jax.random.normal(
        next(k_iter), (NUM_CLASSES,), jnp.float32)
    return params


def pack_params(params):
    """One-time layout plumbing: fuse / zero-pad / pre-transpose / bf16-cast.

    Done at init so the jitted hot path contains no transposes or concats.
    """
    w_fused = jnp.zeros((FS_MAX * EMBED_DIM, NF_PAD), jnp.float32)
    b_fused = jnp.zeros((NF_PAD,), jnp.float32)
    mask = jnp.zeros((SEQ_LEN, NF_PAD), jnp.float32)

    off = 0
    for fs, nf in zip(FILTER_SIZES, NUM_FILTERS):
        w = params[f"conv{fs}_w"]                       # [fs, E, nf]
        w_fused = w_fused.at[: fs * EMBED_DIM, off:off + nf].set(
            w.reshape(fs * EMBED_DIM, nf))
        b_fused = b_fused.at[off:off + nf].set(params[f"conv{fs}_b"])
        l_out = SEQ_LEN - fs + 1
        mask = mask.at[:l_out, off:off + nf].set(1.0)   # valid time positions
        off += nf

    w_fc = jnp.zeros((NF_PAD, C_PAD), jnp.float32)
    w_fc = w_fc.at[:off, :NUM_CLASSES].set(params["fc_w"].T)
    b_fc = jnp.zeros((C_PAD,), jnp.float32).at[:NUM_CLASSES].set(params["fc_b"])

    return {
        "embedding": params["embedding"],
        "w_conv": w_fused.astype(jnp.bfloat16),   # bf16 MXU operands
        "b_conv": b_fused.reshape(1, NF_PAD),
        "mask": mask,
        "w_fc": w_fc.astype(jnp.bfloat16),
        "b_fc": b_fc.reshape(1, C_PAD),
    }


# ----------------------------------------------------------------------------
# Forward
# ----------------------------------------------------------------------------
@jax.jit
def textcnn_forward(input_ids, packed):
    """Equivalent of TextCNNForCalssification.forward({'input_ids': ...})."""
    B, L = input_ids.shape

    # --- glue: embedding lookup (gather) ---
    # TODO(synk): fold this gather into the kernel (PrefetchScalarGridSpec +
    # row-gather DMA) once B*L*E is large enough for the HBM round-trip to matter.
    x = packed["embedding"][input_ids]                   # [B, L, E] f32

    tb = B if B <= 8 else 8                              # batch tile
    grid = (pl.cdiv(B, tb),)

    out_padded = pl.pallas_call(
        textcnn_kernel,
        out_shape=jax.ShapeDtypeStruct((B, C_PAD), jnp.float32),
        grid=grid,
        in_specs=[
            pl.BlockSpec((tb, L, EMBED_DIM), lambda i: (i, 0, 0)),      # x
            pl.BlockSpec((FS_MAX * EMBED_DIM, NF_PAD), lambda i: (0, 0)),  # w_conv
            pl.BlockSpec((1, NF_PAD), lambda i: (0, 0)),                # b_conv
            pl.BlockSpec((SEQ_LEN, NF_PAD), lambda i: (0, 0)),          # mask
            pl.BlockSpec((NF_PAD, C_PAD), lambda i: (0, 0)),            # w_fc
            pl.BlockSpec((1, C_PAD), lambda i: (0, 0)),                 # b_fc
        ],
        out_specs=pl.BlockSpec((tb, C_PAD), lambda i: (i, 0)),
        compiler_params=pltpu.CompilerParams(
            dimension_semantics=("parallel",)),
    )(x, packed["w_conv"], packed["b_conv"], packed["mask"],
      packed["w_fc"], packed["b_fc"])

    return {"logits": out_padded[:, :NUM_CLASSES]}


# ----------------------------------------------------------------------------
# Pure-JAX reference (torch semantics, f32) for a correctness check.
# ----------------------------------------------------------------------------
def _reference_forward(input_ids, params):
    x = params["embedding"][input_ids]                   # [B, L, E]
    pooled_parts = []
    for fs in FILTER_SIZES:
        w = params[f"conv{fs}_w"]                        # [fs, E, nf]
        b = params[f"conv{fs}_b"]
        l_out = SEQ_LEN - fs + 1
        windows = jnp.stack(
            [x[:, k:k + l_out, :] for k in range(fs)], axis=2)  # [B,l_out,fs,E]
        conv = jnp.einsum("blke,kef->blf", windows, w) + b
        pooled_parts.append(jnp.max(jax.nn.relu(conv), axis=1))
    pooled = jnp.concatenate(pooled_parts, axis=-1)
    return pooled @ params["fc_w"].T + params["fc_b"]


if __name__ == "__main__":
    key = jax.random.PRNGKey(0)
    k_params, k_ids = jax.random.split(key)

    params = init_params(k_params)
    packed = pack_params(params)
    input_ids = jax.random.randint(k_ids, (BATCH, SEQ_LEN), 0, VOCAB_SIZE,
                                   dtype=jnp.int32)

    outputs = textcnn_forward(input_ids, packed)
    logits = jax.block_until_ready(outputs["logits"])

    ref = _reference_forward(input_ids, params)
    assert logits.shape == (BATCH, NUM_CLASSES)
    # bf16 matmul operands (f32 accumulation) -> slightly looser tolerance.
    assert jnp.allclose(logits, ref, atol=1e-2, rtol=2e-2), "mismatch vs reference"

    print("KERNEL_OK")
</pallas_src>

<mosaic_0001>
module attributes {stable_mosaic.version = 11 : i64} {
  func.func @textcnn_kernel(%arg0: i32, %arg1: memref<2x16x32xf32, #tpu.memory_space<vmem>>, %arg2: memref<128x128xbf16, #tpu.memory_space<vmem>>, %arg3: memref<1x128xf32, #tpu.memory_space<vmem>>, %arg4: memref<16x128xf32, #tpu.memory_space<vmem>>, %arg5: memref<128x128xbf16, #tpu.memory_space<vmem>>, %arg6: memref<1x128xf32, #tpu.memory_space<vmem>>, %arg7: memref<2x128xf32, #tpu.memory_space<vmem>>) attributes {dimension_semantics = [#tpu.dimension_semantics<parallel>], iteration_bounds = array<i64: 1>, scalar_prefetch = 0 : i64, scratch_operands = 0 : i64, tpu.core_type = #tpu.core_type<tc>, window_params = [{transform_indices = @transform_0, window_bounds = array<i64: 2, 16, 32>}, {pipeline_mode = #tpu.pipeline_mode<synchronous>, transform_indices = @transform_1, window_bounds = array<i64: 128, 128>}, {pipeline_mode = #tpu.pipeline_mode<synchronous>, transform_indices = @transform_2, window_bounds = array<i64: 1, 128>}, {pipeline_mode = #tpu.pipeline_mode<synchronous>, transform_indices = @transform_3, window_bounds = array<i64: 16, 128>}, {pipeline_mode = #tpu.pipeline_mode<synchronous>, transform_indices = @transform_4, window_bounds = array<i64: 128, 128>}, {pipeline_mode = #tpu.pipeline_mode<synchronous>, transform_indices = @transform_5, window_bounds = array<i64: 1, 128>}, {transform_indices = @transform_6, window_bounds = array<i64: 2, 128>}]} {
    %c0 = arith.constant 0 : index
    %c0_0 = arith.constant 0 : index
    %c0_1 = arith.constant 0 : index
    %0 = vector.load %arg1[%c0, %c0_0, %c0_1] : memref<2x16x32xf32, #tpu.memory_space<vmem>>, vector<2x16x32xf32>
    %1 = vector.extract_strided_slice %0 {offsets = [0, 1, 0], sizes = [2, 15, 32], strides = [1, 1, 1]} : vector<2x16x32xf32> to vector<2x15x32xf32>
    %2 = vector.extract_strided_slice %0 {offsets = [0, 0, 0], sizes = [2, 1, 32], strides = [1, 1, 1]} : vector<2x16x32xf32> to vector<2x1x32xf32>
    %3 = tpu.concatenate %1, %2 in 1 : vector<2x15x32xf32>, vector<2x1x32xf32> -> vector<2x16x32xf32>
    %4 = vector.extract_strided_slice %0 {offsets = [0, 2, 0], sizes = [2, 14, 32], strides = [1, 1, 1]} : vector<2x16x32xf32> to vector<2x14x32xf32>
    %5 = vector.extract_strided_slice %0 {offsets = [0, 0, 0], sizes = [2, 2, 32], strides = [1, 1, 1]} : vector<2x16x32xf32> to vector<2x2x32xf32>
    %6 = tpu.concatenate %4, %5 in 1 : vector<2x14x32xf32>, vector<2x2x32xf32> -> vector<2x16x32xf32>
    %7 = vector.extract_strided_slice %0 {offsets = [0, 3, 0], sizes = [2, 13, 32], strides = [1, 1, 1]} : vector<2x16x32xf32> to vector<2x13x32xf32>
    %8 = vector.extract_strided_slice %0 {offsets = [0, 0, 0], sizes = [2, 3, 32], strides = [1, 1, 1]} : vector<2x16x32xf32> to vector<2x3x32xf32>
    %9 = tpu.concatenate %7, %8 in 1 : vector<2x13x32xf32>, vector<2x3x32xf32> -> vector<2x16x32xf32>
    %10 = tpu.concatenate %0, %3, %6, %9 in 2 : vector<2x16x32xf32>, vector<2x16x32xf32>, vector<2x16x32xf32>, vector<2x16x32xf32> -> vector<2x16x128xf32>
    %11 = arith.truncf %10 : vector<2x16x128xf32> to vector<2x16x128xbf16>
    %c0_2 = arith.constant 0 : index
    %c0_3 = arith.constant 0 : index
    %12 = vector.load %arg2[%c0_2, %c0_3] : memref<128x128xbf16, #tpu.memory_space<vmem>>, vector<128x128xbf16>
    %cst = arith.constant dense<0.000000e+00> : vector<2x16x128xf32>
    %13 = tpu.matmul %11, %12, %cst {dimension_numbers = #tpu.dot_dimension_numbers<[2], [0], [0, 1], [1], [0, 0, 0, 1, 1, 1], [], []>} : vector<2x16x128xbf16>, vector<128x128xbf16>, vector<2x16x128xf32> -> vector<2x16x128xf32>
    %c0_4 = arith.constant 0 : index
    %c0_5 = arith.constant 0 : index
    %14 = vector.load %arg3[%c0_4, %c0_5] : memref<1x128xf32, #tpu.memory_space<vmem>>, vector<1x128xf32>
    %15 = vector.shape_cast %14 : vector<1x128xf32> to vector<1x1x128xf32>
    %16 = vector.broadcast %15 : vector<1x1x128xf32> to vector<2x16x128xf32>
    %17 = arith.addf %13, %16 : vector<2x16x128xf32>
    %cst_6 = arith.constant 0.000000e+00 : f32
    %18 = vector.broadcast %cst_6 : f32 to vector<2x16x128xf32>
    %19 = arith.maximumf %17, %18 : vector<2x16x128xf32>
    %c0_7 = arith.constant 0 : index
    %c0_8 = arith.constant 0 : index
    %20 = vector.load %arg4[%c0_7, %c0_8] : memref<16x128xf32, #tpu.memory_space<vmem>>, vector<16x128xf32>
    %21 = vector.shape_cast %20 : vector<16x128xf32> to vector<1x16x128xf32>
    %22 = vector.broadcast %21 : vector<1x16x128xf32> to vector<2x16x128xf32>
    %23 = arith.mulf %19, %22 : vector<2x16x128xf32>
    %cst_9 = arith.constant dense<0xFF800000> : vector<2x128xf32>
    %24 = vector.multi_reduction <maximumf>, %23, %cst_9 [1] : vector<2x16x128xf32> to vector<2x128xf32>
    %25 = arith.truncf %24 : vector<2x128xf32> to vector<2x128xbf16>
    %c0_10 = arith.constant 0 : index
    %c0_11 = arith.constant 0 : index
    %26 = vector.load %arg5[%c0_10, %c0_11] : memref<128x128xbf16, #tpu.memory_space<vmem>>, vector<128x128xbf16>
    %cst_12 = arith.constant dense<0.000000e+00> : vector<2x128xf32>
    %27 = tpu.matmul %25, %26, %cst_12 {dimension_numbers = #tpu.dot_dimension_numbers<[1], [0], [0], [1], [0, 0, 1, 1], [], []>} : vector<2x128xbf16>, vector<128x128xbf16>, vector<2x128xf32> -> vector<2x128xf32>
    %c0_13 = arith.constant 0 : index
    %c0_14 = arith.constant 0 : index
    %28 = vector.load %arg6[%c0_13, %c0_14] : memref<1x128xf32, #tpu.memory_space<vmem>>, vector<1x128xf32>
    %29 = vector.broadcast %28 : vector<1x128xf32> to vector<2x128xf32>
    %30 = arith.addf %27, %29 : vector<2x128xf32>
    %c0_15 = arith.constant 0 : index
    %c0_16 = arith.constant 0 : index
    %31 = vector.load %arg7[%c0_15, %c0_16] : memref<2x128xf32, #tpu.memory_space<vmem>>, vector<2x128xf32>
    tpu.vector_store %arg7[%c0_15, %c0_16], %30 {strides = array<i32>} : memref<2x128xf32, #tpu.memory_space<vmem>>, vector<2x128xf32>,
    return
  }
  func.func @transform_0(%arg0: i32) -> (i32, i32, i32) {
    %c0_i32 = arith.constant 0 : i32
    %c0_i32_0 = arith.constant 0 : i32
    %c0_i32_1 = arith.constant 0 : i32
    return %arg0, %c0_i32, %c0_i32_0 : i32, i32, i32
  }
  func.func @transform_1(%arg0: i32) -> (i32, i32) {
    %c0_i32 = arith.constant 0 : i32
    %c0_i32_0 = arith.constant 0 : i32
    %c0_i32_1 = arith.constant 0 : i32
    return %c0_i32, %c0_i32_0 : i32, i32
  }
  func.func @transform_2(%arg0: i32) -> (i32, i32) {
    %c0_i32 = arith.constant 0 : i32
    %c0_i32_0 = arith.constant 0 : i32
    %c0_i32_1 = arith.constant 0 : i32
    return %c0_i32, %c0_i32_0 : i32, i32
  }
  func.func @transform_3(%arg0: i32) -> (i32, i32) {
    %c0_i32 = arith.constant 0 : i32
    %c0_i32_0 = arith.constant 0 : i32
    %c0_i32_1 = arith.constant 0 : i32
    return %c0_i32, %c0_i32_0 : i32, i32
  }
  func.func @transform_4(%arg0: i32) -> (i32, i32) {
    %c0_i32 = arith.constant 0 : i32
    %c0_i32_0 = arith.constant 0 : i32
    %c0_i32_1 = arith.constant 0 : i32
    return %c0_i32, %c0_i32_0 : i32, i32
  }
  func.func @transform_5(%arg0: i32) -> (i32, i32) {
    %c0_i32 = arith.constant 0 : i32
    %c0_i32_0 = arith.constant 0 : i32
    %c0_i32_1 = arith.constant 0 : i32
    return %c0_i32, %c0_i32_0 : i32, i32
  }
  func.func @transform_6(%arg0: i32) -> (i32, i32) {
    %c0_i32 = arith.constant 0 : i32
    %c0_i32_0 = arith.constant 0 : i32
    return %arg0, %c0_i32 : i32, i32
  }
}

</mosaic_0001>

<llo_original>
// kernel: textcnn_forward.1
$region0: #{textcnn_forward.1}
  #allocation0 [shape = 'u32[]', space=smem, size = 0x4, offset = 0x4, fixed_abs, tag = 'smem constant byte address 0x4 - core index']
  #allocation1 [shape = 'u32[72,128]{1,0:T(1,128)}', space=vmem, size = 0x9000, scoped, tag = 'internal scratch']
  %s0 = inlined_call_operand.vmem [shape: f32[2,16,32], index: 0, kind: input, shape index: {}]
  %s1 = inlined_call_operand.vmem [shape: bf16[128,128], index: 1, kind: input, shape index: {}]
  %s2 = inlined_call_operand.vmem [shape: f32[1,128], index: 2, kind: input, shape index: {}]
  %s3 = inlined_call_operand.vmem [shape: f32[16,128], index: 3, kind: input, shape index: {}]
  %s4 = inlined_call_operand.vmem [shape: bf16[128,128], index: 4, kind: input, shape index: {}]
  %s5 = inlined_call_operand.vmem [shape: f32[1,128], index: 5, kind: input, shape index: {}]
  %s6 = inlined_call_operand.hbm [shape: f32[2,128], index: 6, kind: output, shape index: {}]
  %s7 = sld [smem:[#allocation0]]
  $region34: #{textcnn_forward.1} parent=0
    _
  %s9 = ssub.s32 1, %s7
  %s10 = scalar_select 0, %s9, %s7
  $region1: #{textcnn_forward.1} parent=0
    #allocation2 [shape = 'u8[1024]{0}', space=vmem, size = 0x400, scoped, tag = 'output window, operand 0, single buffered']
    #allocation3 [shape = 's32[1]{0}', space=sflag, size = 0x4, scoped, tag = 'scoped memory for textcnn_forward.1']
    %11 = vsyncpa [#allocation3], 0
    // Predicated region
    $region2: #{textcnn_forward.1} parent=1 // pred_check
      _
    $region3: #{textcnn_forward.1} parent=1 // pred_check_branch
      %13 = sbr.rel (0) target = $region5
    $region4: #{textcnn_forward.1} parent=1 // pred_region
      _
    $region5: #{textcnn_forward.1} parent=1 // pred_fallthru
      _
    // Predicated region
    $region6: #{textcnn_forward.1} parent=1 // pred_check
      _
    $region7: #{textcnn_forward.1} parent=1 // pred_check_branch
      %15 = sbr.rel (0) target = $region9
    $region8: #{textcnn_forward.1} parent=1 // pred_region
      _
    $region9: #{textcnn_forward.1} parent=1 // pred_fallthru
      _
    // Predicated region
    $region10: #{textcnn_forward.1} parent=1 // pred_check
      _
    $region11: #{textcnn_forward.1} parent=1 // pred_check_branch
      %17 = sbr.rel (0) target = $region13
    $region12: #{textcnn_forward.1} parent=1 // pred_region
      _
    $region13: #{textcnn_forward.1} parent=1 // pred_fallthru
      _
    // Predicated region
    $region14: #{textcnn_forward.1} parent=1 // pred_check
      _
    $region15: #{textcnn_forward.1} parent=1 // pred_check_branch
      %19 = sbr.rel (0) target = $region17
    $region16: #{textcnn_forward.1} parent=1 // pred_region
      _
    $region17: #{textcnn_forward.1} parent=1 // pred_fallthru
      _
    // Predicated region
    $region18: #{textcnn_forward.1} parent=1 // pred_check
      _
    $region19: #{textcnn_forward.1} parent=1 // pred_check_branch
      %21 = sbr.rel (0) target = $region21
    $region20: #{textcnn_forward.1} parent=1 // pred_region
      _
    $region21: #{textcnn_forward.1} parent=1 // pred_fallthru
      _
    // Predicated region
    $region22: #{textcnn_forward.1} parent=1 // pred_check
      _
    $region23: #{textcnn_forward.1} parent=1 // pred_check_branch
      %23 = sbr.rel (0) target = $region25
    $region24: #{textcnn_forward.1} parent=1 // pred_region
      _
    $region25: #{textcnn_forward.1} parent=1 // pred_fallthru
      _
    %v24 = vld [vmem:[%s0] sm:$0xff]
    %v25 = vld [vmem:[%s0 + $0x8] sm:$0xff]
    %v26 = vld [vmem:[%s0 + $0x10] sm:$0xff]
    %v27 = vld [vmem:[%s0 + $0x18] sm:$0xff]
    %vm32 = vcmask 1046528
    %v33 = vrot.slane %v24, 1
    %v34 = vrot.slane %v25, 1
    %v35 = vsel %vm32, %v33, %v34
    %v36 = vrot.slane %v26, 1
    %v37 = vrot.slane %v27, 1
    %v38 = vsel %vm32, %v36, %v37
    %v43 = vsel %vm32, %v34, %v33
    %v44 = vsel %vm32, %v37, %v36
    %vm45 = vcmask 1045504
    %v46 = vrot.slane %v24, 2
    %v47 = vrot.slane %v25, 2
    %v48 = vsel %vm45, %v46, %v47
    %v49 = vrot.slane %v26, 2
    %v50 = vrot.slane %v27, 2
    %v51 = vsel %vm45, %v49, %v50
    %v56 = vsel %vm45, %v47, %v46
    %v57 = vsel %vm45, %v50, %v49
    %vm58 = vcmask 1044480
    %v59 = vrot.slane %v24, 3
    %v60 = vrot.slane %v25, 3
    %v61 = vsel %vm58, %v59, %v60
    %v62 = vrot.slane %v26, 3
    %v63 = vrot.slane %v27, 3
    %v64 = vsel %vm58, %v62, %v63
    %v69 = vsel %vm58, %v60, %v59
    %v70 = vsel %vm58, %v63, %v62
    %73 = vrot.lane.b32.xlu0 %v35, 32
    %v74 = vpop.permute.xlu0 %73
    %75 = vrot.lane.b32.xlu0 %v43, 32
    %v76 = vpop.permute.xlu0 %75
    %77 = vrot.lane.b32.xlu0 %v38, 32
    %v78 = vpop.permute.xlu0 %77
    %79 = vrot.lane.b32.xlu0 %v44, 32
    %v80 = vpop.permute.xlu0 %79
    %87 = vrot.lane.b32.xlu0 %v48, 64
    %v88 = vpop.permute.xlu0 %87
    %89 = vrot.lane.b32.xlu0 %v56, 64
    %v90 = vpop.permute.xlu0 %89
    %91 = vrot.lane.b32.xlu0 %v51, 64
    %v92 = vpop.permute.xlu0 %91
    %93 = vrot.lane.b32.xlu0 %v57, 64
    %v94 = vpop.permute.xlu0 %93
    %101 = vrot.lane.b32.xlu0 %v61, 96
    %v102 = vpop.permute.xlu0 %101
    %103 = vrot.lane.b32.xlu0 %v69, 96
    %v104 = vpop.permute.xlu0 %103
    %105 = vrot.lane.b32.xlu0 %v64, 96
    %v106 = vpop.permute.xlu0 %105
    %107 = vrot.lane.b32.xlu0 %v70, 96
    %v108 = vpop.permute.xlu0 %107
    %vm113 = vcmask 261120
    %v114 = vsel %vm113, %v24, %v74
    %v115 = vsel %vm113, %v25, %v76
    %v116 = vsel %vm113, %v26, %v78
    %v117 = vsel %vm113, %v27, %v80
    %vm118 = vcmask 523264
    %v119 = vsel %vm118, %v114, %v88
    %v120 = vsel %vm118, %v115, %v90
    %v121 = vsel %vm118, %v116, %v92
    %v122 = vsel %vm118, %v117, %v94
    %vm123 = vcmask 785408
    %v124 = vsel %vm123, %v119, %v102
    %v125 = vsel %vm123, %v120, %v104
    %v126 = vsel %vm123, %v121, %v106
    %v127 = vsel %vm123, %v122, %v108
    %v128 = vpack.c.bf16 %v124, %v124
    %v129 = vpack.c.bf16 %v125, %v125
    %v130 = vpack.c.bf16 %v126, %v126
    %v131 = vpack.c.bf16 %v127, %v127
    %v132 = vld [vmem:[%s1] sm:$0xf]
    %v133 = vld [vmem:[%s1 + $0x4] sm:$0xf]
    %v134 = vld [vmem:[%s1 + $0x8] sm:$0xf]
    %v135 = vld [vmem:[%s1 + $0xc] sm:$0xf]
    %v136 = vld [vmem:[%s1 + $0x10] sm:$0xf]
    %v137 = vld [vmem:[%s1 + $0x14] sm:$0xf]
    %v138 = vld [vmem:[%s1 + $0x18] sm:$0xf]
    %v139 = vld [vmem:[%s1 + $0x1c] sm:$0xf]
    %v140 = vld [vmem:[%s1 + $0x20] sm:$0xf]
    %v141 = vld [vmem:[%s1 + $0x24] sm:$0xf]
    %v142 = vld [vmem:[%s1 + $0x28] sm:$0xf]
    %v143 = vld [vmem:[%s1 + $0x2c] sm:$0xf]
    %v144 = vld [vmem:[%s1 + $0x30] sm:$0xf]
    %v145 = vld [vmem:[%s1 + $0x34] sm:$0xf]
    %v146 = vld [vmem:[%s1 + $0x38] sm:$0xf]
    %v147 = vld [vmem:[%s1 + $0x3c] sm:$0xf]
    %v148 = vld [vmem:[%s2] sm:$0x1]
    %v150 = vperm.slane %v148, 0
    %v156 = vunpack.c.l.b16 %v128
    %v157 = vunpack.c.l.b16 %v129
    %v158 = vunpack.c.l.b16 %v130
    %v159 = vunpack.c.l.b16 %v131
    %v160 = vpack.c.b16 %v157, %v156
    %v161 = vpack.c.b16 %v159, %v158
    %v180 = vunpack.c.l.b16 %v132
    %v181 = vunpack.c.l.b16 %v133
    %v182 = vunpack.c.l.b16 %v134
    %v183 = vunpack.c.l.b16 %v135
    %v184 = vunpack.c.l.b16 %v136
    %v185 = vunpack.c.l.b16 %v137
    %v186 = vunpack.c.l.b16 %v138
    %v187 = vunpack.c.l.b16 %v139
    %v188 = vunpack.c.l.b16 %v140
    %v189 = vunpack.c.l.b16 %v141
    %v190 = vunpack.c.l.b16 %v142
    %v191 = vunpack.c.l.b16 %v143
    %v192 = vunpack.c.l.b16 %v144
    %v193 = vunpack.c.l.b16 %v145
    %v194 = vunpack.c.l.b16 %v146
    %v195 = vunpack.c.l.b16 %v147
    %v196 = vpack.c.b16 %v181, %v180
    %v197 = vpack.c.b16 %v183, %v182
    %v198 = vpack.c.b16 %v185, %v184
    %v199 = vpack.c.b16 %v187, %v186
    %v200 = vpack.c.b16 %v189, %v188
    %v201 = vpack.c.b16 %v191, %v190
    %v202 = vpack.c.b16 %v193, %v192
    %v203 = vpack.c.b16 %v195, %v194
    %212 = vmatpush.bf16.msra.mxu0 %v203
    %213 = vmatpush.bf16.msra.mxu0 %v202
    %214 = vmatpush.bf16.msra.mxu0 %v201
    %215 = vmatpush.bf16.msra.mxu0 %v200
    %216 = vmatpush.bf16.msra.mxu0 %v199
    %217 = vmatpush.bf16.msra.mxu0 %v198
    %218 = vmatpush.bf16.msra.mxu0 %v197
    %219 = vmatpush.bf16.msra.mxu0 %v196
    %220 = vmatmul.bf16.gmra.mxu0 %v160
    %v221 = vpop.f32.mrf.mxu0
    %v222 = vadd.f32 %v150, %v221
    %v223 = vpop.f32.mrf.mxu0
    %v224 = vadd.f32 %v150, %v223
    %225 = vmatmul.bf16.gmra.mxu0 %v161
    %v226 = vpop.f32.mrf.mxu0
    %v227 = vadd.f32 %v150, %v226
    %v228 = vpop.f32.mrf.mxu0
    %v229 = vadd.f32 %v150, %v228
    %230 = vdwg.mxu0
    %v231 = vmax.f32 %v222, 0.0
    %v232 = vmax.f32 %v224, 0.0
    %v233 = vmax.f32 %v227, 0.0
    %v234 = vmax.f32 %v229, 0.0
    %v235 = vld [vmem:[%s3] sm:$0xff]
    %v236 = vld [vmem:[%s3 + $0x8] sm:$0xff]
    %v237 = vmul.f32 %v231, %v235
    %v238 = vmul.f32 %v232, %v236
    %v239 = vmul.f32 %v233, %v235
    %v240 = vmul.f32 %v234, %v236
    %v241 = vmax.f32 %v237, %v238
    %v242 = vrot.slane %v241, 4
    %v243 = vmax.f32 %v241, %v242
    %v244 = vrot.slane %v243, 2
    %v245 = vmax.f32 %v243, %v244
    %v246 = vrot.slane %v245, 1
    %v247 = vmax.f32 %v245, %v246
    %v248 = vmax.f32 %v239, %v240
    %v249 = vrot.slane %v248, 4
    %v250 = vmax.f32 %v248, %v249
    %v251 = vrot.slane %v250, 2
    %v252 = vmax.f32 %v250, %v251
    %v253 = vrot.slane %v252, 1
    %v254 = vmax.f32 %v252, %v253
    %v255 = vpack.c.bf16 %v247, %v247
    %v256 = vpack.c.bf16 %v254, %v254
    %v257 = vld [vmem:[%s4] sm:$0xf]
    %v258 = vld [vmem:[%s4 + $0x4] sm:$0xf]
    %v259 = vld [vmem:[%s4 + $0x8] sm:$0xf]
    %v260 = vld [vmem:[%s4 + $0xc] sm:$0xf]
    %v261 = vld [vmem:[%s4 + $0x10] sm:$0xf]
    %v262 = vld [vmem:[%s4 + $0x14] sm:$0xf]
    %v263 = vld [vmem:[%s4 + $0x18] sm:$0xf]
    %v264 = vld [vmem:[%s4 + $0x1c] sm:$0xf]
    %v265 = vld [vmem:[%s4 + $0x20] sm:$0xf]
    %v266 = vld [vmem:[%s4 + $0x24] sm:$0xf]
    %v267 = vld [vmem:[%s4 + $0x28] sm:$0xf]
    %v268 = vld [vmem:[%s4 + $0x2c] sm:$0xf]
    %v269 = vld [vmem:[%s4 + $0x30] sm:$0xf]
    %v270 = vld [vmem:[%s4 + $0x34] sm:$0xf]
    %v271 = vld [vmem:[%s4 + $0x38] sm:$0xf]
    %v272 = vld [vmem:[%s4 + $0x3c] sm:$0xf]
    %v273 = vld [vmem:[%s5] sm:$0x1]
    %v275 = vperm.slane %v273, 0
    %v279 = vunpack.c.l.b16 %v255
    %v280 = vunpack.c.l.b16 %v256
    %vm281 = vcmask 1041409
    %v282 = vsel %vm281, %v280, %v279
    %v283 = vpack.c.b16 %v282, %v282
    %v301 = vunpack.c.l.b16 %v257
    %v302 = vunpack.c.l.b16 %v258
    %v303 = vunpack.c.l.b16 %v259
    %v304 = vunpack.c.l.b16 %v260
    %v305 = vunpack.c.l.b16 %v261
    %v306 = vunpack.c.l.b16 %v262
    %v307 = vunpack.c.l.b16 %v263
    %v308 = vunpack.c.l.b16 %v264
    %v309 = vunpack.c.l.b16 %v265
    %v310 = vunpack.c.l.b16 %v266
    %v311 = vunpack.c.l.b16 %v267
    %v312 = vunpack.c.l.b16 %v268
    %v313 = vunpack.c.l.b16 %v269
    %v314 = vunpack.c.l.b16 %v270
    %v315 = vunpack.c.l.b16 %v271
    %v316 = vunpack.c.l.b16 %v272
    %v317 = vpack.c.b16 %v302, %v301
    %v318 = vpack.c.b16 %v304, %v303
    %v319 = vpack.c.b16 %v306, %v305
    %v320 = vpack.c.b16 %v308, %v307
    %v321 = vpack.c.b16 %v310, %v309
    %v322 = vpack.c.b16 %v312, %v311
    %v323 = vpack.c.b16 %v314, %v313
    %v324 = vpack.c.b16 %v316, %v315
    %333 = vmatpush.bf16.msra.mxu0 %v324
    %334 = vmatpush.bf16.msra.mxu0 %v323
    %335 = vmatpush.bf16.msra.mxu0 %v322
    %336 = vmatpush.bf16.msra.mxu0 %v321
    %337 = vmatpush.bf16.msra.mxu0 %v320
    %338 = vmatpush.bf16.msra.mxu0 %v319
    %339 = vmatpush.bf16.msra.mxu0 %v318
    %340 = vmatpush.bf16.msra.mxu0 %v317
    %341 = vmatmul.bf16.gmra.mxu0 %v283
    %v342 = vpop.f32.mrf.mxu0
    %v343 = vadd.f32 %v275, %v342
    %v344 = vpop.f32.mrf.mxu0
    %345 = vdwg.mxu0
    %346 = vst [vmem:[#allocation2] sm:$0x3] %v343
    // Predicated region
    $region26: #{textcnn_forward.1} parent=1 // pred_check
      _
    $region27: #{textcnn_forward.1} parent=1 // pred_check_branch
      %348 = sbr.rel (0) target = $region29
    $region28: #{textcnn_forward.1} parent=1 // pred_region
      %350 = vsyncadd [#allocation3], 0
      %s352 = sshll.u32 [#allocation2], 4
      %s353 = int_to_ptr.vmem [resolvable:$true] %s352
      %s354 = sshll.u32 %s6, 4
      %s355 = int_to_ptr.hbm [resolvable:$true] %s354
      %357 = dma.vmem_to_hbm [thread:$0]  %s353, 32, %s355, [#allocation3]
    $region29: #{textcnn_forward.1} parent=1 // pred_fallthru
      _
    // Predicated region
    $region30: #{textcnn_forward.1} parent=1 // pred_check
      _
    $region31: #{textcnn_forward.1} parent=1 // pred_check_branch
      %359 = sbr.rel (0) target = $region33
    $region32: #{textcnn_forward.1} parent=1 // pred_region
      %361 = dma.done [#allocation3], 32
    $region33: #{textcnn_forward.1} parent=1 // pred_fallthru
      _
    %362 = vsyncpa [#allocation3], 1

</llo_original>
